<compile_context>
chip_gen: v5e
topology: v5e:2x2
jax: 0.10.0
libtpu: 0.0.40
codegen_flags: <defaults>
</compile_context>

<pallas_src>
import math
import functools

import jax
import jax.numpy as jnp
from jax.experimental import pallas as pl
from jax.experimental.pallas import tpu as pltpu

# ---------------- model hyper-params (small, deterministic) ----------------
BATCH       = 8
LATENT_DIM  = 8
N_BATCH     = 4          # one-hot batch (source) dim
NN_LAYER2   = 32         # fc4 output
NN_LAYER1   = 32         # fc5 output
N_FEATURES  = 16
SPARSITY    = 0.9
COUNT_MODEL = "zeroinflatedpoisson"
BN_EPS      = 0.001

SELU_ALPHA = 1.6732632423543772
SELU_SCALE = 1.0507009873554804

# ---- packed-slab layout (rows are 8-aligned per block) ----
IN_DIM    = LATENT_DIM + N_BATCH      # 12
IN_PAD    = 16                        # fc4 input dim padded to 16 (zeros)
HEAD_DIM  = N_FEATURES + 2            # 18: [prob(16) | nr(1) | dp(1)]
HEAD_PAD  = 32                        # padded head output width
SLAB_COLS = 32                        # = NN_LAYER2 = NN_LAYER1 = HEAD_PAD
assert NN_LAYER2 == SLAB_COLS and NN_LAYER1 == SLAB_COLS and HEAD_PAD == SLAB_COLS

R_W4 = 0                              # rows  0:16  -> folded fc4 weight (12 used)
R_W5 = R_W4 + IN_PAD                  # rows 16:48  -> folded fc5 weight
R_WH = R_W5 + NN_LAYER2               # rows 48:80  -> fused head weight (18 cols used)
R_B  = R_WH + NN_LAYER1               # rows 80:88  -> biases: 80=b4, 81=b5, 82=b_head
SLAB_ROWS = R_B + 8                   # 88


def _selu(x):
    return SELU_SCALE * jnp.where(x > 0, x, SELU_ALPHA * (jnp.exp(x) - 1.0))


def _softplus(x):
    # numerically stable softplus (VPU + EUP)
    return jnp.maximum(x, 0.0) + jnp.log1p(jnp.exp(-jnp.abs(x)))


# ------------------------------ Pallas kernel ------------------------------
def decoder_kernel(cond_ref, slab_ref, out_ref, *, softplus_threshold):
    x  = cond_ref[...]                                   # (B, 16)
    w4 = slab_ref[R_W4:R_W4 + IN_PAD, :]                 # (16, 32)  BN-folded
    w5 = slab_ref[R_W5:R_W5 + NN_LAYER2, :]              # (32, 32)  BN-folded
    wh = slab_ref[R_WH:R_WH + NN_LAYER1, :]              # (32, 32)  fused heads
    b4 = slab_ref[R_B + 0:R_B + 1, :]                    # (1, 32)
    b5 = slab_ref[R_B + 1:R_B + 2, :]                    # (1, 32)
    bh = slab_ref[R_B + 2:R_B + 3, :]                    # (1, 32)

    # fc4 (+folded BN4) -> SELU
    h = _selu(jnp.dot(x, w4, preferred_element_type=jnp.float32) + b4)
    # fc5 (+folded BN5) -> SELU -> clamp(max=1e7)
    h = _selu(jnp.dot(h, w5, preferred_element_type=jnp.float32) + b5)
    h = jnp.minimum(h, 1.0e7)

    # one fused head matmul: cols 0..15 = out_fc, 16 = noise_fc, 17 = dropoutprob
    heads = jnp.dot(h, wh, preferred_element_type=jnp.float32) + bh   # (B, 32)

    col = jax.lax.broadcasted_iota(jnp.int32, heads.shape, dimension=1)
    is_prob = col < N_FEATURES

    # mysoftplus + hnormalization (only over the prob columns)
    sp = _softplus(heads) - softplus_threshold
    sp = jnp.where(sp <= 0.0, 0.0, sp)
    sp = jnp.where(is_prob, sp, 0.0)
    denom = jnp.sum(sp, axis=1, keepdims=True) + 1e-5
    prob = sp * pl.reciprocal(denom, approx=False)

    # mytanh for nr / dp columns.  torch.nan_to_num is dead code here (no NaN
    # reachable: h clamped, tanh bounded), so it is intentionally dropped.
    tanh_half = (1.0 + jnp.tanh(heads)) * 0.5

    out_ref[...] = jnp.where(is_prob, prob, tanh_half)


# ------------------------------ host wrapper -------------------------------
def _pack_slab(params):
    """Fold BN into fc4/fc5, fuse the three heads, pack everything into one slab."""
    s4 = params["bn4_g"] / jnp.sqrt(params["bn4_rv"] + BN_EPS)
    t4 = params["bn4_b"] - params["bn4_rm"] * s4
    s5 = params["bn5_g"] / jnp.sqrt(params["bn5_rv"] + BN_EPS)
    t5 = params["bn5_b"] - params["bn5_rm"] * s5

    w4f = params["w4"] * s4[None, :]                       # (12, 32)
    b4f = params["b4"] * s4 + t4                           # (32,)
    w5f = params["w5"] * s5[None, :]                       # (32, 32)
    b5f = params["b5"] * s5 + t5                           # (32,)

    wh = jnp.concatenate([params["w_out"], params["w_nr"], params["w_dp"]], axis=1)  # (32, 18)
    bh = jnp.concatenate([params["b_out"], params["b_nr"], params["b_dp"]])          # (18,)
    wh = jnp.pad(wh, ((0, 0), (0, HEAD_PAD - HEAD_DIM)))
    bh = jnp.pad(bh, (0, HEAD_PAD - HEAD_DIM))

    w4p = jnp.pad(w4f, ((0, IN_PAD - IN_DIM), (0, 0)))     # (16, 32)

    bias_block = jnp.zeros((8, SLAB_COLS), jnp.float32)
    bias_block = bias_block.at[0].set(b4f).at[1].set(b5f).at[2].set(bh)

    slab = jnp.concatenate([w4p, w5f, wh, bias_block], axis=0)   # (88, 32)
    return slab


@jax.jit
def decoder_forward(sampling, batch_id_onehot, params):
    B = sampling.shape[0]
    # concat + zero-pad the fc4 input to IN_PAD columns (padded W4 rows are zero)
    cond = jnp.concatenate(
        [sampling, batch_id_onehot, jnp.zeros((B, IN_PAD - IN_DIM), jnp.float32)],
        axis=1)

    slab = _pack_slab(params)

    softplus_threshold = float(math.log1p(math.exp(-(1.0 - SPARSITY) * 10.0)))
    kernel = functools.partial(decoder_kernel, softplus_threshold=softplus_threshold)

    out = pl.pallas_call(
        kernel,
        out_shape=jax.ShapeDtypeStruct((B, HEAD_PAD), jnp.float32),
        in_specs=[
            pl.BlockSpec(memory_space=pltpu.MemorySpace.VMEM),   # cond (whole array)
            pl.BlockSpec(memory_space=pltpu.MemorySpace.VMEM),   # packed slab
        ],
        out_specs=pl.BlockSpec(memory_space=pltpu.MemorySpace.VMEM),
    )(cond, slab)

    dec_prob = out[:, :N_FEATURES]
    dec_nr   = out[:, N_FEATURES:N_FEATURES + 1]
    dec_dp   = out[:, N_FEATURES + 1:N_FEATURES + 2]
    return dec_nr, dec_prob, dec_dp


# ------------------------ pure-JAX reference (check) ------------------------
def decoder_reference(sampling, batch_id_onehot, params):
    cond = jnp.concatenate([sampling, batch_id_onehot], axis=1)

    def bn(x, g, b, rm, rv):
        return (x - rm) / jnp.sqrt(rv + BN_EPS) * g + b

    h = cond @ params["w4"] + params["b4"]
    h = _selu(bn(h, params["bn4_g"], params["bn4_b"], params["bn4_rm"], params["bn4_rv"]))
    h = h @ params["w5"] + params["b5"]
    h = _selu(bn(h, params["bn5_g"], params["bn5_b"], params["bn5_rm"], params["bn5_rv"]))
    h = jnp.minimum(h, 1.0e7)

    p = h @ params["w_out"] + params["b_out"]
    thr = jnp.log1p(jnp.exp(-(1.0 - SPARSITY) * 10.0))
    sp = jax.nn.softplus(p) - thr
    sp = jnp.where(sp <= 0.0, 0.0, sp)
    prob = sp / (jnp.sum(sp, axis=1, keepdims=True) + 1e-5)

    nr = (1.0 + jnp.tanh(h @ params["w_nr"] + params["b_nr"])) * 0.5
    dp = (1.0 + jnp.tanh(h @ params["w_dp"] + params["b_dp"])) * 0.5
    dp = jnp.where(jnp.isnan(dp), 1e-7, dp)
    return nr, prob, dp


# --------------------------------- main -------------------------------------
def init_params(key):
    """Deterministic PyTorch-style init. Linear weights stored as (in, out)."""
    keys = jax.random.split(key, 12)

    def linear(kw, kb, fan_in, fan_out):
        bound = 1.0 / math.sqrt(fan_in)
        w = jax.random.uniform(kw, (fan_in, fan_out), jnp.float32, -bound, bound)
        b = jax.random.uniform(kb, (fan_out,), jnp.float32, -bound, bound)
        return w, b

    in_dim = LATENT_DIM + N_BATCH
    w4, b4 = linear(keys[0], keys[1], in_dim, NN_LAYER2)
    w5, b5 = linear(keys[2], keys[3], NN_LAYER2, NN_LAYER1)
    w_out, b_out = linear(keys[4], keys[5], NN_LAYER1, N_FEATURES)
    w_nr, b_nr = linear(keys[6], keys[7], NN_LAYER1, 1)
    w_dp, b_dp = linear(keys[8], keys[9], NN_LAYER1, 1)

    return dict(
        w4=w4, b4=b4,
        bn4_g=jnp.ones((NN_LAYER2,), jnp.float32), bn4_b=jnp.zeros((NN_LAYER2,), jnp.float32),
        bn4_rm=jnp.zeros((NN_LAYER2,), jnp.float32), bn4_rv=jnp.ones((NN_LAYER2,), jnp.float32),
        w5=w5, b5=b5,
        bn5_g=jnp.ones((NN_LAYER1,), jnp.float32), bn5_b=jnp.zeros((NN_LAYER1,), jnp.float32),
        bn5_rm=jnp.zeros((NN_LAYER1,), jnp.float32), bn5_rv=jnp.ones((NN_LAYER1,), jnp.float32),
        w_out=w_out, b_out=b_out,
        w_nr=w_nr, b_nr=b_nr,
        w_dp=w_dp, b_dp=b_dp,
    )


if __name__ == "__main__":
    key = jax.random.PRNGKey(0)
    k_samp, k_batch, k_param = jax.random.split(key, 3)

    sampling = jax.random.normal(k_samp, (BATCH, LATENT_DIM), jnp.float32)
    batch_ids = jax.random.randint(k_batch, (BATCH,), 0, N_BATCH)
    batch_id_onehot = jax.nn.one_hot(batch_ids, N_BATCH, dtype=jnp.float32)

    params = init_params(k_param)

    dec_nr, dec_prob, dec_dp = decoder_forward(sampling, batch_id_onehot, params)
    jax.block_until_ready((dec_nr, dec_prob, dec_dp))

    ref_nr, ref_prob, ref_dp = decoder_reference(sampling, batch_id_onehot, params)
    assert dec_nr.shape == (BATCH, 1)
    assert dec_prob.shape == (BATCH, N_FEATURES)
    assert dec_dp.shape == (BATCH, 1)
    assert jnp.allclose(dec_nr, ref_nr, atol=1e-5, rtol=1e-5)
    assert jnp.allclose(dec_prob, ref_prob, atol=1e-5, rtol=1e-5)
    assert jnp.allclose(dec_dp, ref_dp, atol=1e-5, rtol=1e-5)

    print("KERNEL_OK")
</pallas_src>

<mosaic_0001>
module attributes {stable_mosaic.version = 11 : i64} {
  func.func @decoder_kernel(%arg0: memref<8x16xf32, #tpu.memory_space<vmem>>, %arg1: memref<88x32xf32, #tpu.memory_space<vmem>>, %arg2: memref<8x32xf32, #tpu.memory_space<vmem>>) attributes {dimension_semantics = [], scalar_prefetch = 0 : i64, scratch_operands = 0 : i64, tpu.core_type = #tpu.core_type<tc>} {
    %c0 = arith.constant 0 : index
    %c0_0 = arith.constant 0 : index
    %0 = vector.load %arg0[%c0, %c0_0] : memref<8x16xf32, #tpu.memory_space<vmem>>, vector<8x16xf32>
    %c0_1 = arith.constant 0 : index
    %c0_2 = arith.constant 0 : index
    %1 = vector.load %arg1[%c0_1, %c0_2] : memref<88x32xf32, #tpu.memory_space<vmem>>, vector<16x32xf32>
    %c16 = arith.constant 16 : index
    %c0_3 = arith.constant 0 : index
    %2 = vector.load %arg1[%c16, %c0_3] : memref<88x32xf32, #tpu.memory_space<vmem>>, vector<32x32xf32>
    %c48 = arith.constant 48 : index
    %c0_4 = arith.constant 0 : index
    %3 = vector.load %arg1[%c48, %c0_4] : memref<88x32xf32, #tpu.memory_space<vmem>>, vector<32x32xf32>
    %c80 = arith.constant 80 : index
    %c0_5 = arith.constant 0 : index
    %4 = vector.load %arg1[%c80, %c0_5] : memref<88x32xf32, #tpu.memory_space<vmem>>, vector<1x32xf32>
    %c81 = arith.constant 81 : index
    %c0_6 = arith.constant 0 : index
    %5 = vector.load %arg1[%c81, %c0_6] : memref<88x32xf32, #tpu.memory_space<vmem>>, vector<1x32xf32>
    %c82 = arith.constant 82 : index
    %c0_7 = arith.constant 0 : index
    %6 = vector.load %arg1[%c82, %c0_7] : memref<88x32xf32, #tpu.memory_space<vmem>>, vector<1x32xf32>
    %cst = arith.constant dense<0.000000e+00> : vector<8x32xf32>
    %7 = tpu.matmul %0, %1, %cst {dimension_numbers = #tpu.dot_dimension_numbers<[1], [0], [0], [1], [0, 0, 1, 1], [], []>} : vector<8x16xf32>, vector<16x32xf32>, vector<8x32xf32> -> vector<8x32xf32>
    %8 = vector.broadcast %4 : vector<1x32xf32> to vector<8x32xf32>
    %9 = arith.addf %7, %8 : vector<8x32xf32>
    %cst_8 = arith.constant 0.000000e+00 : f32
    %10 = vector.broadcast %cst_8 : f32 to vector<8x32xf32>
    %11 = arith.cmpf ogt, %9, %10 : vector<8x32xf32>
    %12 = math.exp %9 : vector<8x32xf32>
    %cst_9 = arith.constant 1.000000e+00 : f32
    %13 = vector.broadcast %cst_9 : f32 to vector<8x32xf32>
    %14 = arith.subf %12, %13 : vector<8x32xf32>
    %cst_10 = arith.constant 1.67326319 : f32
    %15 = vector.broadcast %cst_10 : f32 to vector<8x32xf32>
    %16 = arith.mulf %15, %14 : vector<8x32xf32>
    %17 = arith.select %11, %9, %16 : vector<8x32xi1>, vector<8x32xf32>
    %cst_11 = arith.constant 1.05070102 : f32
    %18 = vector.broadcast %cst_11 : f32 to vector<8x32xf32>
    %19 = arith.mulf %18, %17 : vector<8x32xf32>
    %cst_12 = arith.constant dense<0.000000e+00> : vector<8x32xf32>
    %20 = tpu.matmul %19, %2, %cst_12 {dimension_numbers = #tpu.dot_dimension_numbers<[1], [0], [0], [1], [0, 0, 1, 1], [], []>} : vector<8x32xf32>, vector<32x32xf32>, vector<8x32xf32> -> vector<8x32xf32>
    %21 = vector.broadcast %5 : vector<1x32xf32> to vector<8x32xf32>
    %22 = arith.addf %20, %21 : vector<8x32xf32>
    %cst_13 = arith.constant 0.000000e+00 : f32
    %23 = vector.broadcast %cst_13 : f32 to vector<8x32xf32>
    %24 = arith.cmpf ogt, %22, %23 : vector<8x32xf32>
    %25 = math.exp %22 : vector<8x32xf32>
    %cst_14 = arith.constant 1.000000e+00 : f32
    %26 = vector.broadcast %cst_14 : f32 to vector<8x32xf32>
    %27 = arith.subf %25, %26 : vector<8x32xf32>
    %cst_15 = arith.constant 1.67326319 : f32
    %28 = vector.broadcast %cst_15 : f32 to vector<8x32xf32>
    %29 = arith.mulf %28, %27 : vector<8x32xf32>
    %30 = arith.select %24, %22, %29 : vector<8x32xi1>, vector<8x32xf32>
    %cst_16 = arith.constant 1.05070102 : f32
    %31 = vector.broadcast %cst_16 : f32 to vector<8x32xf32>
    %32 = arith.mulf %31, %30 : vector<8x32xf32>
    %cst_17 = arith.constant 1.000000e+07 : f32
    %33 = vector.broadcast %cst_17 : f32 to vector<8x32xf32>
    %34 = arith.minimumf %32, %33 : vector<8x32xf32>
    %cst_18 = arith.constant dense<0.000000e+00> : vector<8x32xf32>
    %35 = tpu.matmul %34, %3, %cst_18 {dimension_numbers = #tpu.dot_dimension_numbers<[1], [0], [0], [1], [0, 0, 1, 1], [], []>} : vector<8x32xf32>, vector<32x32xf32>, vector<8x32xf32> -> vector<8x32xf32>
    %36 = vector.broadcast %6 : vector<1x32xf32> to vector<8x32xf32>
    %37 = arith.addf %35, %36 : vector<8x32xf32>
    %38 = tpu.iota {dimensions = array<i32: 1>} : vector<8x32xi32>
    %c16_i32 = arith.constant 16 : i32
    %39 = vector.broadcast %c16_i32 : i32 to vector<8x32xi32>
    %40 = arith.cmpi slt, %38, %39 : vector<8x32xi32>
    %cst_19 = arith.constant 0.000000e+00 : f32
    %41 = vector.broadcast %cst_19 : f32 to vector<8x32xf32>
    %42 = arith.maximumf %37, %41 : vector<8x32xf32>
    %43 = math.absf %37 : vector<8x32xf32>
    %cst_20 = arith.constant 0.000000e+00 : f32
    %44 = vector.broadcast %cst_20 : f32 to vector<8x32xf32>
    %45 = arith.subf %44, %43 : vector<8x32xf32>
    %46 = math.exp %45 : vector<8x32xf32>
    %47 = math.log1p %46 : vector<8x32xf32>
    %48 = arith.addf %42, %47 : vector<8x32xf32>
    %cst_21 = arith.constant 0.313261688 : f32
    %49 = vector.broadcast %cst_21 : f32 to vector<8x32xf32>
    %50 = arith.subf %48, %49 : vector<8x32xf32>
    %cst_22 = arith.constant 0.000000e+00 : f32
    %51 = vector.broadcast %cst_22 : f32 to vector<8x32xf32>
    %52 = arith.cmpf ole, %50, %51 : vector<8x32xf32>
    %cst_23 = arith.constant 0.000000e+00 : f32
    %53 = vector.broadcast %cst_23 : f32 to vector<8x32xf32>
    %54 = arith.select %52, %53, %50 : vector<8x32xi1>, vector<8x32xf32>
    %cst_24 = arith.constant 0.000000e+00 : f32
    %55 = vector.broadcast %cst_24 : f32 to vector<8x32xf32>
    %56 = arith.select %40, %54, %55 : vector<8x32xi1>, vector<8x32xf32>
    %cst_25 = arith.constant dense<0.000000e+00> : vector<8xf32>
    %57 = vector.multi_reduction <add>, %56, %cst_25 [1] : vector<8x32xf32> to vector<8xf32>
    %58 = vector.shape_cast %57 : vector<8xf32> to vector<8x1xf32>
    %cst_26 = arith.constant 9.99999974E-6 : f32
    %59 = vector.broadcast %cst_26 : f32 to vector<8x1xf32>
    %60 = arith.addf %58, %59 : vector<8x1xf32>
    %61 = tpu.reciprocal %60 : vector<8x1xf32> -> vector<8x1xf32>
    %62 = vector.broadcast %61 : vector<8x1xf32> to vector<8x32xf32>
    %63 = arith.mulf %56, %62 : vector<8x32xf32>
    %64 = math.tanh %37 : vector<8x32xf32>
    %cst_27 = arith.constant 1.000000e+00 : f32
    %65 = vector.broadcast %cst_27 : f32 to vector<8x32xf32>
    %66 = arith.addf %65, %64 : vector<8x32xf32>
    %cst_28 = arith.constant 5.000000e-01 : f32
    %67 = vector.broadcast %cst_28 : f32 to vector<8x32xf32>
    %68 = arith.mulf %66, %67 : vector<8x32xf32>
    %69 = arith.select %40, %63, %68 : vector<8x32xi1>, vector<8x32xf32>
    %c0_29 = arith.constant 0 : index
    %c0_30 = arith.constant 0 : index
    %70 = vector.load %arg2[%c0_29, %c0_30] : memref<8x32xf32, #tpu.memory_space<vmem>>, vector<8x32xf32>
    tpu.vector_store %arg2[%c0_29, %c0_30], %69 {strides = array<i32>} : memref<8x32xf32, #tpu.memory_space<vmem>>, vector<8x32xf32>,
    return
  }
}

</mosaic_0001>

<llo_original>
// kernel: decoder_forward.1
$region0: #{decoder_forward.1}
  #allocation0 [shape = 'u32[]', space=smem, size = 0x4, offset = 0x4, fixed_abs, tag = 'smem constant byte address 0x4 - core index']
  #allocation1 [shape = 'u32[72,128]{1,0:T(1,128)}', space=vmem, size = 0x9000, scoped, tag = 'internal scratch']
  %s0 = inlined_call_operand.vmem [shape: f32[8,16], index: 0, kind: input, shape index: {}]
  %s1 = inlined_call_operand.vmem [shape: f32[88,32], index: 1, kind: input, shape index: {}]
  %s2 = inlined_call_operand.vmem [shape: f32[8,32], index: 2, kind: output, shape index: {}]
  %s3 = sld [smem:[#allocation0]]
  $region18: #{decoder_forward.1} parent=0
    _
  %s5 = ssub.s32 1, %s3
  %s6 = scalar_select 0, %s5, %s3
  // Predicated region
  $region2: #{decoder_forward.1} parent=0 // pred_check
    _
  $region3: #{decoder_forward.1} parent=0 // pred_check_branch
    %8 = sbr.rel (0) target = $region5
  $region4: #{decoder_forward.1} parent=0 // pred_region
    _
  $region5: #{decoder_forward.1} parent=0 // pred_fallthru
    _
  // Predicated region
  $region6: #{decoder_forward.1} parent=0 // pred_check
    _
  $region7: #{decoder_forward.1} parent=0 // pred_check_branch
    %10 = sbr.rel (0) target = $region9
  $region8: #{decoder_forward.1} parent=0 // pred_region
    _
  $region9: #{decoder_forward.1} parent=0 // pred_fallthru
    _
  %v11 = vld [vmem:[%s0] sm:$0xff]
  %v12 = vld [vmem:[%s1] sm:$0xff]
  %v13 = vld [vmem:[%s1 + $0x8] sm:$0xff]
  %v14 = vld [vmem:[%s1 + $0x10] sm:$0xff]
  %v15 = vld [vmem:[%s1 + $0x18] sm:$0xff]
  %v16 = vld [vmem:[%s1 + $0x20] sm:$0xff]
  %v17 = vld [vmem:[%s1 + $0x28] sm:$0xff]
  %v18 = vld [vmem:[%s1 + $0x30] sm:$0xff]
  %v19 = vld [vmem:[%s1 + $0x38] sm:$0xff]
  %v20 = vld [vmem:[%s1 + $0x40] sm:$0xff]
  %v21 = vld [vmem:[%s1 + $0x48] sm:$0xff]
  %v22 = vld [vmem:[%s1 + $0x50] sm:$0x1]
  %v23 = vld [vmem:[%s1 + $0x51] sm:$0x1]
  %v24 = vld [vmem:[%s1 + $0x52] sm:$0x1]
  %v25 = vperm.slane %v22, 0
  %vm26 = vcmask 130048
  %v28 = vsel %vm26, %v11, 0
  %30 = vmatpush.msra.mxu0 0.0
  %31 = vmatpush.msra.mxu0 0.0
  %32 = vmatpush.msra.mxu0 0.0
  %33 = vmatpush.msra.mxu0 0.0
  %34 = vmatpush.msra.mxu0 0.0
  %35 = vmatpush.msra.mxu0 0.0
  %36 = vmatpush.msra.mxu0 0.0
  %37 = vmatpush.msra.mxu0 0.0
  %38 = vmatpush.msra.mxu0 0.0
  %39 = vmatpush.msra.mxu0 0.0
  %40 = vmatpush.msra.mxu0 0.0
  %41 = vmatpush.msra.mxu0 0.0
  %42 = vmatpush.msra.mxu0 0.0
  %43 = vmatpush.msra.mxu0 0.0
  %44 = vmatpush.msra.mxu0 %v13
  %45 = vmatpush.msra.mxu0 %v12
  %46 = vmatmul.f32.gmra.mxu0 %v28
  %v47 = vpop.f32.mrf.mxu0
  %v48 = vadd.f32 %v25, %v47
  %49 = vdwg.mxu0
  %vm50 = vcmp.gt.f32.partialorder %v48, 0.0
  %v51 = vmul.f32 %v48, 1.442695
  %v52 = vpow.pop %v51
  %v53 = vsub.f32 %v52, 1.0
  %v54 = vmul.f32 %v53, 1.6732632
  %v55 = vsel %vm50, %v48, %v54
  %v56 = vmul.f32 %v55, 1.050701
  %v57 = vperm.slane %v23, 0
  %vm58 = vcmask 261120
  %v60 = vsel %vm58, %v56, 0
  %62 = vmatpush.msra.mxu0 0.0
  %63 = vmatpush.msra.mxu0 0.0
  %64 = vmatpush.msra.mxu0 0.0
  %65 = vmatpush.msra.mxu0 0.0
  %66 = vmatpush.msra.mxu0 0.0
  %67 = vmatpush.msra.mxu0 0.0
  %68 = vmatpush.msra.mxu0 0.0
  %69 = vmatpush.msra.mxu0 0.0
  %70 = vmatpush.msra.mxu0 0.0
  %71 = vmatpush.msra.mxu0 0.0
  %72 = vmatpush.msra.mxu0 0.0
  %73 = vmatpush.msra.mxu0 0.0
  %74 = vmatpush.msra.mxu0 %v17
  %75 = vmatpush.msra.mxu0 %v16
  %76 = vmatpush.msra.mxu0 %v15
  %77 = vmatpush.msra.mxu0 %v14
  %78 = vmatmul.f32.gmra.mxu0 %v60
  %v79 = vpop.f32.mrf.mxu0
  %v80 = vadd.f32 %v57, %v79
  %81 = vdwg.mxu0
  %vm82 = vcmp.gt.f32.partialorder %v80, 0.0
  %v83 = vmul.f32 %v80, 1.442695
  %v84 = vpow.pop %v83
  %v85 = vsub.f32 %v84, 1.0
  %v86 = vmul.f32 %v85, 1.6732632
  %v87 = vsel %vm82, %v80, %v86
  %v88 = vmul.f32 %v87, 1.050701
  %v89 = vmin.f32 %v88, 10000000.0
  %v90 = vperm.slane %v24, 0
  %v92 = vsel %vm58, %v89, 0
  %94 = vmatpush.msra.mxu0 0.0
  %95 = vmatpush.msra.mxu0 0.0
  %96 = vmatpush.msra.mxu0 0.0
  %97 = vmatpush.msra.mxu0 0.0
  %98 = vmatpush.msra.mxu0 0.0
  %99 = vmatpush.msra.mxu0 0.0
  %100 = vmatpush.msra.mxu0 0.0
  %101 = vmatpush.msra.mxu0 0.0
  %102 = vmatpush.msra.mxu0 0.0
  %103 = vmatpush.msra.mxu0 0.0
  %104 = vmatpush.msra.mxu0 0.0
  %105 = vmatpush.msra.mxu0 0.0
  %106 = vmatpush.msra.mxu0 %v21
  %107 = vmatpush.msra.mxu0 %v20
  %108 = vmatpush.msra.mxu0 %v19
  %109 = vmatpush.msra.mxu0 %v18
  %110 = vmatmul.f32.gmra.mxu0 %v92
  %v111 = vpop.f32.mrf.mxu0
  %v112 = vadd.f32 %v90, %v111
  %113 = vdwg.mxu0
  %v114 = vlaneseq
  %v115 = vand.u32 %v114, 127
  %vm116 = vcmp.lt.s32.totalorder %v115, 16
  %v117 = vmax.f32 %v112, 0.0
  %v118 = vand.u32 2147483647, %v112
  %v119 = vsub.f32 0.0, %v118
  %v120 = vmul.f32 %v119, 1.442695
  %v121 = vpow.pop %v120
  %v122 = vadd.f32 %v121, 1.0
  %v123 = vlog2.pop %v122
  %v124 = vmul.f32 %v123, 0.6931472
  %v125 = vmul.f32 -0.5, %v121
  %v126 = vadd.f32 %v125, 1.0
  %v127 = vmul.f32 %v126, %v121
  %v128 = vand.u32 2147483647, %v121
  %vm129 = vcmp.lt.f32.partialorder %v128, 0.0004427343
  %v130 = vsel %vm129, %v127, %v124
  %v131 = vadd.f32 %v117, %v130
  %v132 = vsub.f32 %v131, 0.3132617
  %vm133 = vcmp.le.f32.partialorder %v132, 0.0
  %v134 = vsel %vm133, 0.0, %v132
  %v135 = vsel %vm116, %v134, 0.0
  %v136 = vsel %vm58, %v135, 0.0
  %137 = vadd.xlane.f32.xlu0 %v136
  %v138 = vpop.xlane.xlu0 %137
  %v139 = vadd.f32 %v138, 1e-05
  %v140 = vrcp.pop %v139
  %v141 = vmul.f32 %v139, %v140
  %v142 = vsub.f32 1.0, %v141
  %v143 = vmul.f32 %v140, %v142
  %v144 = vadd.f32 %v140, %v143
  %vm145 = vweird.f32 %v139
  %vm146 = vweird.f32 %v140
  %vm147 = vmor %vm145, %vm146
  %v148 = vsel %vm147, %v140, %v144
  %v149 = vand.u32 2147483647, %v139
  %vm150 = vcmp.eq.f32.partialorder %v149, 8.507059e+37
  %v151 = vand.u32 %v139, 2147483648
  %v152 = vor.u32 1.1754944e-38, %v151
  %v153 = vsel %vm150, %v152, %v148
  %v154 = vmul.f32 %v135, %v153
  %v155 = vtanh.pop %v112
  %v156 = vadd.f32 %v155, 1.0
  %v157 = vmul.f32 %v156, 0.5
  %v158 = vsel %vm116, %v154, %v157
  %159 = vst.msk [vmem:[%s2] sm:$0xff] %vm58, %v158
  // Predicated region
  $region10: #{decoder_forward.1} parent=0 // pred_check
    _
  $region11: #{decoder_forward.1} parent=0 // pred_check_branch
    %161 = sbr.rel (0) target = $region13
  $region12: #{decoder_forward.1} parent=0 // pred_region
    _
  $region13: #{decoder_forward.1} parent=0 // pred_fallthru
    _
  // Predicated region
  $region14: #{decoder_forward.1} parent=0 // pred_check
    _
  $region15: #{decoder_forward.1} parent=0 // pred_check_branch
    %163 = sbr.rel (0) target = $region17
  $region16: #{decoder_forward.1} parent=0 // pred_region
    _
  $region17: #{decoder_forward.1} parent=0 // pred_fallthru
    _

</llo_original>
